<compile_context>
chip_gen: v7x
topology: tpu7x:2x2x1
jax: 0.10.0
libtpu: 0.0.40
codegen_flags: <defaults>
</compile_context>

<pallas_src>
import functools
import math

import jax
import jax.numpy as jnp
import numpy as np
from jax.experimental import pallas as pl
from jax.experimental.pallas import tpu as pltpu

ALPHA = 0.5
GAMMA = 1.0
LABEL_SMOOTHING = 0.1


def focal_ace_kernel(logits_ref, counts_ref, out_ref, acc_ref, *,
                     T, B, t_tile, alpha, gamma, needs_mask):
    """One T-tile of the ACE loss.

    logits_ref: (B, C, t_tile) VMEM block (classes on sublanes, time on lanes)
    counts_ref: (B, C) VMEM, resident; only read in the epilogue
    out_ref:    (1, 128) f32 VMEM, scalar loss broadcast across one lane row
    acc_ref:    (B, C) f32 VMEM scratch, accumulates sum_t softmax(logits)
    """
    t = pl.program_id(0)
    nt = pl.num_programs(0)

    @pl.when(t == 0)
    def _init():
        acc_ref[...] = jnp.zeros_like(acc_ref)

    x = logits_ref[...].astype(jnp.float32)                  # (B, C, t_tile)
    m = jnp.max(x, axis=1, keepdims=True)                    # (B, 1, t_tile)
    e = jnp.exp(x - m)                                       # one exp per element
    denom = jnp.sum(e, axis=1, keepdims=True)                # (B, 1, t_tile)
    inv = pl.reciprocal(denom, approx=True)                  # EUP, frees VALU
    p = e * inv                                              # softmax over classes

    if needs_mask:
        # Last tile may run past T: zero padded time columns before accumulating.
        col = jax.lax.broadcasted_iota(jnp.int32, (1, 1, t_tile), 2) + t * t_tile
        p = jnp.where(col < T, p, 0.0)

    acc_ref[...] += jnp.sum(p, axis=2)                       # (B, C)

    @pl.when(t == nt - 1)
    def _epilogue():
        counts = counts_ref[...].astype(jnp.float32)         # (B, C)
        s = acc_ref[...]                                     # sum_t softmax, > 0
        # loss = -sum(counts/T * log(s/T)) / B
        #      = -(sum(counts*log(s)) - log(T)*sum(counts)) / (B*T)
        term = jnp.sum(counts * jnp.log(s))
        total = jnp.sum(counts)
        loss = -(term - math.log(T) * total) * (1.0 / (B * T))
        pfoc = jnp.exp(-loss)
        if gamma == 1.0:
            focal = alpha * (1.0 - pfoc) * loss
        else:
            focal = alpha * jnp.power(1.0 - pfoc, gamma) * loss
        out_ref[...] = jnp.full((1, 128), focal, dtype=jnp.float32)


def build_smoothed_target_counts(targets, target_lengths, T, num_classes, ls):
    """Device-side (jittable) equivalent of torch.split + pad_sequence + one_hot
    + label smoothing + sum over the sequence axis + column-0 overwrite."""
    lengths = jnp.asarray(target_lengths).astype(jnp.int32)
    tgt = jnp.asarray(targets).astype(jnp.int32)
    bs = lengths.shape[0]
    csum = jnp.cumsum(lengths)
    pos = jnp.arange(tgt.shape[0], dtype=jnp.int32)
    batch_id = jnp.searchsorted(csum, pos, side="right").astype(jnp.int32)
    # per-batch histogram of target classes
    n = jnp.zeros((bs, num_classes), jnp.float32).at[batch_id, tgt].add(1.0)
    max_len = jnp.max(lengths).astype(jnp.float32)
    smooth = ls / (num_classes - 1)
    # every padded-sequence row contributes (1-ls) to its class, ls/(C-1) elsewhere;
    # padding rows (value 0) only matter for column 0, which is overwritten below.
    counts = n * (1.0 - ls) + (max_len - n) * smooth
    counts = counts.at[:, 0].set(jnp.float32(T) - lengths.astype(jnp.float32))
    return counts


def _pick_t_tile(B, C, T, itemsize, t_tile=None, budget_bytes=8 << 20):
    """Choose a lane (time) tile: full T for small problems, else a multiple of
    128 sized so one input buffer stays under ~8 MiB (v7x-safe)."""
    if t_tile is None:
        per_t = max(B * C * itemsize, 1)
        cap = max(budget_bytes // per_t, 1)
        if T <= 128 or cap >= T:
            t_tile = T
        else:
            t_tile = max((cap // 128) * 128, 128)
            if t_tile >= T:
                t_tile = T
    t_tile = min(int(t_tile), T)
    if t_tile != T and t_tile % 128 != 0:
        raise ValueError("t_tile must be a multiple of 128 or the full T")
    return t_tile, (T % t_tile != 0)


def focal_ace_loss(logits_bct, targets, input_lengths, target_lengths,
                   alpha=ALPHA, gamma=GAMMA, ls=LABEL_SMOOTHING, t_tile=None):
    # input_lengths is unused, exactly as in the PyTorch module.
    B, C, T = logits_bct.shape
    counts = build_smoothed_target_counts(targets, target_lengths, T, C, ls)

    itemsize = jnp.dtype(logits_bct.dtype).itemsize
    t_tile, needs_mask = _pick_t_tile(B, C, T, itemsize, t_tile=t_tile)
    nt = pl.cdiv(T, t_tile)

    kernel = functools.partial(
        focal_ace_kernel, T=T, B=B, t_tile=t_tile,
        alpha=float(alpha), gamma=float(gamma), needs_mask=needs_mask)

    # double-buffered logits tile + counts + accumulator + headroom
    vmem_need = 2 * B * C * t_tile * itemsize + 6 * B * C * 4 + (2 << 20)
    vmem_limit = int(min(100 << 20, max(16 << 20, vmem_need)))

    out = pl.pallas_call(
        kernel,
        out_shape=jax.ShapeDtypeStruct((1, 128), jnp.float32),
        grid_spec=pltpu.PrefetchScalarGridSpec(
            num_scalar_prefetch=0,
            grid=(nt,),
            in_specs=[
                pl.BlockSpec((B, C, t_tile), lambda t: (0, 0, t)),
                pl.BlockSpec((B, C), lambda t: (0, 0)),
            ],
            out_specs=pl.BlockSpec((1, 128), lambda t: (0, 0)),
            scratch_shapes=[pltpu.VMEM((B, C), jnp.float32)],
        ),
        compiler_params=pltpu.CompilerParams(
            dimension_semantics=("arbitrary",),
            vmem_limit_bytes=vmem_limit),
    )(logits_bct, counts)
    return out[0, 0]


# ---------------------------------------------------------------------------
# References for the self-test
# ---------------------------------------------------------------------------

def _host_smoothed_target_counts(targets, target_lengths, T, num_classes, ls):
    """Literal host-side replica of the PyTorch target-count construction."""
    lengths = np.asarray(target_lengths)
    t_np = np.asarray(targets)
    bs = lengths.shape[0]
    max_len = int(lengths.max())
    padded = np.zeros((bs, max_len), dtype=np.int64)
    off = 0
    for b, L in enumerate(lengths):
        L = int(L)
        padded[b, :L] = t_np[off:off + L]
        off += L
    oh = np.eye(num_classes, dtype=np.float64)[padded]          # (bs, max_len, C)
    sm = oh * (1.0 - ls) + (1.0 - oh) * (ls / (num_classes - 1))
    counts = sm.sum(axis=1)
    counts[:, 0] = float(T) - lengths.astype(np.float64)
    return counts.astype(np.float32)


def _reference_loss(logits_bct, counts, alpha, gamma):
    """Pure-JAX reference of the same math (exact softmax)."""
    B, C, T = logits_bct.shape
    probs = jax.nn.softmax(logits_bct.astype(jnp.float32), axis=1)   # over classes
    probs = jnp.sum(probs, axis=2) / T                               # (B, C)
    tgt = counts / T
    loss = -jnp.sum(tgt * jnp.log(probs)) / B
    p = jnp.exp(-loss)
    return alpha * jnp.power(1.0 - p, gamma) * loss


if __name__ == "__main__":
    key = jax.random.PRNGKey(0)
    k1, k2 = jax.random.split(key)

    B, C, T = 2, 32, 272                 # T = 2*128 + 16 -> multi-tile + tail mask
    target_lengths = jnp.array([5, 7], dtype=jnp.int32)
    input_lengths = jnp.full((B,), T, dtype=jnp.int32)
    total_targets = int(np.asarray(target_lengths).sum())

    logits = jax.random.normal(k1, (B, C, T), dtype=jnp.float32)
    targets = jax.random.randint(k2, (total_targets,), 1, C, dtype=jnp.int32)

    loss_fn = jax.jit(focal_ace_loss,
                      static_argnames=("alpha", "gamma", "ls", "t_tile"))

    # Tiled/pipelined path: 3 grid steps over T, last tile masked.
    loss_tiled = jax.block_until_ready(
        loss_fn(logits, targets, input_lengths, target_lengths, t_tile=128))
    # Auto-tiled path (whole T fits a single block at this size).
    loss_auto = jax.block_until_ready(
        loss_fn(logits, targets, input_lengths, target_lengths))

    # Check the on-device target-count builder against the PyTorch-style host
    # construction, and the kernel against a pure-JAX reference.
    counts_dev = jax.block_until_ready(
        build_smoothed_target_counts(targets, target_lengths, T, C, LABEL_SMOOTHING))
    counts_host = _host_smoothed_target_counts(
        np.asarray(targets), np.asarray(target_lengths), T, C, LABEL_SMOOTHING)
    np.testing.assert_allclose(np.asarray(counts_dev), counts_host,
                               rtol=1e-5, atol=1e-5)

    ref = jax.block_until_ready(_reference_loss(logits, counts_dev, ALPHA, GAMMA))
    # Loose-ish rtol: kernel uses the EUP approximate reciprocal for softmax.
    np.testing.assert_allclose(np.asarray(loss_tiled), np.asarray(ref),
                               rtol=5e-3, atol=1e-5)
    np.testing.assert_allclose(np.asarray(loss_auto), np.asarray(ref),
                               rtol=5e-3, atol=1e-5)

    print("KERNEL_OK")
</pallas_src>

<mosaic_0001>
module attributes {stable_mosaic.version = 11 : i64} {
  func.func @focal_ace_kernel(%arg0: i32, %arg1: memref<2x32x128xf32, #tpu.memory_space<vmem>>, %arg2: memref<2x32xf32, #tpu.memory_space<vmem>>, %arg3: memref<1x128xf32, #tpu.memory_space<vmem>>, %arg4: memref<2x32xf32, #tpu.memory_space<vmem>>) attributes {dimension_semantics = [#tpu.dimension_semantics<arbitrary>], iteration_bounds = array<i64: 3>, scalar_prefetch = 0 : i64, scratch_operands = 1 : i64, tpu.core_type = #tpu.core_type<tc>, window_params = [{transform_indices = @transform_0, window_bounds = array<i64: 2, 32, 128>}, {pipeline_mode = #tpu.pipeline_mode<synchronous>, transform_indices = @transform_1, window_bounds = array<i64: 2, 32>}, {pipeline_mode = #tpu.pipeline_mode<synchronous>, transform_indices = @transform_2, window_bounds = array<i64: 1, 128>}]} {
    %c0_i32 = arith.constant 0 : i32
    %0 = arith.cmpi eq, %arg0, %c0_i32 : i32
    %1 = arith.extui %0 : i1 to i32
    %c0_i32_0 = arith.constant 0 : i32
    %2 = arith.cmpi ne, %1, %c0_i32_0 : i32
    scf.if %2 {
      %cst_11 = arith.constant 0.000000e+00 : f32
      %31 = vector.broadcast %cst_11 : f32 to vector<2x32xf32>
      %c0_12 = arith.constant 0 : index
      %c0_13 = arith.constant 0 : index
      %32 = vector.load %arg4[%c0_12, %c0_13] : memref<2x32xf32, #tpu.memory_space<vmem>>, vector<2x32xf32>
      tpu.vector_store %arg4[%c0_12, %c0_13], %31 {strides = array<i32>} : memref<2x32xf32, #tpu.memory_space<vmem>>, vector<2x32xf32>,
    } else {
    }
    %c0 = arith.constant 0 : index
    %c0_1 = arith.constant 0 : index
    %c0_2 = arith.constant 0 : index
    %3 = vector.load %arg1[%c0, %c0_1, %c0_2] : memref<2x32x128xf32, #tpu.memory_space<vmem>>, vector<2x32x128xf32>
    %cst = arith.constant dense<0xFF800000> : vector<2x128xf32>
    %4 = vector.multi_reduction <maximumf>, %3, %cst [1] : vector<2x32x128xf32> to vector<2x128xf32>
    %5 = vector.shape_cast %4 : vector<2x128xf32> to vector<2x1x128xf32>
    %6 = vector.broadcast %5 : vector<2x1x128xf32> to vector<2x32x128xf32>
    %7 = arith.subf %3, %6 : vector<2x32x128xf32>
    %8 = math.exp %7 : vector<2x32x128xf32>
    %cst_3 = arith.constant dense<0.000000e+00> : vector<2x128xf32>
    %9 = vector.multi_reduction <add>, %8, %cst_3 [1] : vector<2x32x128xf32> to vector<2x128xf32>
    %10 = vector.shape_cast %9 : vector<2x128xf32> to vector<2x1x128xf32>
    %11 = tpu.reciprocal %10 {approx = true} : vector<2x1x128xf32> -> vector<2x1x128xf32>
    %12 = vector.broadcast %11 : vector<2x1x128xf32> to vector<2x32x128xf32>
    %13 = arith.mulf %8, %12 : vector<2x32x128xf32>
    %14 = tpu.iota {dimensions = array<i32: 2>} : vector<1x1x128xi32>
    %c128_i32 = arith.constant 128 : i32
    %15 = arith.muli %arg0, %c128_i32 : i32
    %16 = vector.broadcast %15 : i32 to vector<1x1x128xi32>
    %17 = arith.addi %14, %16 : vector<1x1x128xi32>
    %c272_i32 = arith.constant 272 : i32
    %18 = vector.broadcast %c272_i32 : i32 to vector<1x1x128xi32>
    %19 = arith.cmpi slt, %17, %18 : vector<1x1x128xi32>
    %cst_4 = arith.constant 0.000000e+00 : f32
    %20 = vector.shape_cast %19 : vector<1x1x128xi1> to vector<1x1x128xi1>
    %21 = vector.broadcast %20 : vector<1x1x128xi1> to vector<2x32x128xi1>
    %22 = vector.broadcast %cst_4 : f32 to vector<2x32x128xf32>
    %23 = arith.select %21, %13, %22 : vector<2x32x128xi1>, vector<2x32x128xf32>
    %c0_5 = arith.constant 0 : index
    %c0_6 = arith.constant 0 : index
    %24 = vector.load %arg4[%c0_5, %c0_6] : memref<2x32xf32, #tpu.memory_space<vmem>>, vector<2x32xf32>
    %cst_7 = arith.constant dense<0.000000e+00> : vector<2x32xf32>
    %25 = vector.multi_reduction <add>, %23, %cst_7 [2] : vector<2x32x128xf32> to vector<2x32xf32>
    %26 = arith.addf %24, %25 : vector<2x32xf32>
    %c0_8 = arith.constant 0 : index
    %c0_9 = arith.constant 0 : index
    %27 = vector.load %arg4[%c0_8, %c0_9] : memref<2x32xf32, #tpu.memory_space<vmem>>, vector<2x32xf32>
    tpu.vector_store %arg4[%c0_8, %c0_9], %26 {strides = array<i32>} : memref<2x32xf32, #tpu.memory_space<vmem>>, vector<2x32xf32>,
    %c2_i32 = arith.constant 2 : i32
    %28 = arith.cmpi eq, %arg0, %c2_i32 : i32
    %29 = arith.extui %28 : i1 to i32
    %c0_i32_10 = arith.constant 0 : i32
    %30 = arith.cmpi ne, %29, %c0_i32_10 : i32
    scf.if %30 {
      %c0_11 = arith.constant 0 : index
      %c0_12 = arith.constant 0 : index
      %31 = vector.load %arg2[%c0_11, %c0_12] : memref<2x32xf32, #tpu.memory_space<vmem>>, vector<2x32xf32>
      %c0_13 = arith.constant 0 : index
      %c0_14 = arith.constant 0 : index
      %32 = vector.load %arg4[%c0_13, %c0_14] : memref<2x32xf32, #tpu.memory_space<vmem>>, vector<2x32xf32>
      %33 = math.log %32 : vector<2x32xf32>
      %34 = arith.mulf %31, %33 : vector<2x32xf32>
      %35 = vector.shape_cast %34 : vector<2x32xf32> to vector<1x2x32xf32>
      %cst_15 = arith.constant dense<0.000000e+00> : vector<1xf32>
      %36 = vector.multi_reduction <add>, %35, %cst_15 [1, 2] : vector<1x2x32xf32> to vector<1xf32>
      %37 = vector.shape_cast %36 : vector<1xf32> to vector<1x1x1xf32>
      %38 = vector.extract %37[0, 0, 0] : f32 from vector<1x1x1xf32>
      %39 = vector.shape_cast %31 : vector<2x32xf32> to vector<1x2x32xf32>
      %cst_16 = arith.constant dense<0.000000e+00> : vector<1xf32>
      %40 = vector.multi_reduction <add>, %39, %cst_16 [1, 2] : vector<1x2x32xf32> to vector<1xf32>
      %41 = vector.shape_cast %40 : vector<1xf32> to vector<1x1x1xf32>
      %42 = vector.extract %41[0, 0, 0] : f32 from vector<1x1x1xf32>
      %cst_17 = arith.constant 5.60580206 : f32
      %43 = arith.mulf %cst_17, %42 : f32
      %44 = arith.subf %38, %43 : f32
      %cst_18 = arith.constant 0.000000e+00 : f32
      %45 = arith.subf %cst_18, %44 : f32
      %cst_19 = arith.constant 0.0018382353 : f32
      %46 = arith.mulf %45, %cst_19 : f32
      %cst_20 = arith.constant 0.000000e+00 : f32
      %47 = arith.subf %cst_20, %46 : f32
      %48 = math.exp %47 : f32
      %cst_21 = arith.constant 1.000000e+00 : f32
      %49 = arith.subf %cst_21, %48 : f32
      %cst_22 = arith.constant 5.000000e-01 : f32
      %50 = arith.mulf %cst_22, %49 : f32
      %51 = arith.mulf %50, %46 : f32
      %52 = vector.broadcast %51 : f32 to vector<1x128xf32>
      %c0_23 = arith.constant 0 : index
      %c0_24 = arith.constant 0 : index
      %53 = vector.load %arg3[%c0_23, %c0_24] : memref<1x128xf32, #tpu.memory_space<vmem>>, vector<1x128xf32>
      tpu.vector_store %arg3[%c0_23, %c0_24], %52 {strides = array<i32>} : memref<1x128xf32, #tpu.memory_space<vmem>>, vector<1x128xf32>,
    } else {
    }
    return
  }
  func.func @transform_0(%arg0: i32) -> (i32, i32, i32) {
    %c0_i32 = arith.constant 0 : i32
    %c0_i32_0 = arith.constant 0 : i32
    %c0_i32_1 = arith.constant 0 : i32
    return %c0_i32, %c0_i32_0, %arg0 : i32, i32, i32
  }
  func.func @transform_1(%arg0: i32) -> (i32, i32) {
    %c0_i32 = arith.constant 0 : i32
    %c0_i32_0 = arith.constant 0 : i32
    %c0_i32_1 = arith.constant 0 : i32
    return %c0_i32, %c0_i32_0 : i32, i32
  }
  func.func @transform_2(%arg0: i32) -> (i32, i32) {
    %c0_i32 = arith.constant 0 : i32
    %c0_i32_0 = arith.constant 0 : i32
    %c0_i32_1 = arith.constant 0 : i32
    return %c0_i32, %c0_i32_0 : i32, i32
  }
}

</mosaic_0001>

<llo_original>
// kernel: custom-call.2
$region0: #{custom-call.2}
  %s0 = inlined_call_operand.vmem [shape: u32[12], index: 0, kind: output, shape index: {}]

// kernel: focal_ace_loss.1
$region0: #{focal_ace_loss.1}
  #allocation0 [shape = 'u32[]', space=smem, size = 0x4, offset = 0x4, fixed_abs, tag = 'smem constant byte address 0x4 - core index']
  #allocation1 [shape = 'u32[144,128]{1,0:T(1,128)}', space=vmem, size = 0x12000, scoped, tag = 'internal scratch']
  #allocation2 [shape = 'f32[2,32]{1,0:T(2,128)}', space=vmem, size = 0x400, scoped, tag = 'scratch operand']
  %s0 = inlined_call_operand.vmem [shape: f32[2,32,272], index: 0, kind: input, shape index: {}]
  %s1 = inlined_call_operand.vmem [shape: f32[2,32], index: 1, kind: input, shape index: {}]
  %s2 = inlined_call_operand.hbm [shape: f32[1,128], index: 2, kind: output, shape index: {}]
  %s3 = sld [smem:[#allocation0]]
  $region87: #{focal_ace_loss.1} parent=0
    _
  %s5 = ssub.s32 1, %s3
  %s6 = scalar_select 0, %s5, %s3
  $region1: #{focal_ace_loss.1} parent=0
    #allocation3 [shape = 'u8[65536]{0}', space=vmem, size = 0x10000, scoped, tag = 'input window, operand 0']
    #allocation4 [shape = 'u8[512]{0}', space=vmem, size = 0x400, scoped, tag = 'output window, operand 0, single buffered']
    #allocation5 [shape = 's32[2]{0}', space=sflag, size = 0x8, scoped, tag = 'scoped memory for focal_ace_loss.1']
    %7 = vsyncpa [#allocation5], 0
    loop: start=0, step=1, limit=5
    $region2: #{focal_ace_loss.1} parent=1 // loop_pre_header
      _
    $region3: #{focal_ace_loss.1} parent=1 // loop_header
      %s9 = sphi 0, %s13
      %p10 = scmp.ge.s32.totalorder %s9, 5
      %s19 = sphi 0, %s21
      %s22 = sphi 0, %s19
      %s23 = sphi 0, %s22
      %s39 = sphi 0, %s23
      %s43 = sphi 0, %s43
      %s45 = sphi 0, %s43
      %s46 = sphi 0, %s45
      %s60 = sphi 0, %s46
      %s64 = sphi 0, %s64
      %s66 = sphi 0, %s64
      %s67 = sphi 0, %s66
      %s81 = sphi 0, %s67
    $region4: #{focal_ace_loss.1} parent=1 // loop_header_branch
      %12 = sbr.rel (%p10) target = $region8
    $region5: #{focal_ace_loss.1} parent=1 // loop_body
      %s14 = ssub.s32 %s9, 1
      %s15 = ssub.s32 %s9, 2
      %s16 = sadd.s32 %s9, 1
      %s17 = ssub.s32 %s9, %s16
      %p18 = scmp.eq.s32.totalorder %s17, 0
      %s20 = sadd.s32 %s19, 1
      %s21 = scalar_select %p18, %s19, %s20
      %p24 = pneg %p18
      %p25 = scmp.eq.s32.totalorder %s9, 2
      %p26 = por %p24, %p25
      %p27 = scmp.ne.s32.totalorder %s19, %s22
      %p28 = scmp.eq.s32.totalorder %s9, 0
      %p29 = por %p27, %p28
      %p30 = scmp.ne.s32.totalorder %s19, %s22
      %p31 = scmp.eq.s32.totalorder %s14, 2
      %p32 = por %p30, %p31
      %p33 = scmp.ne.s32.totalorder %s22, %s23
      %p34 = scmp.eq.s32.totalorder %s14, 0
      %p35 = por %p33, %p34
      %p36 = scmp.ne.s32.totalorder %s22, %s23
      %p37 = scmp.eq.s32.totalorder %s15, 2
      %p38 = por %p36, %p37
      %p40 = scmp.ne.s32.totalorder %s23, %s39
      %p41 = scmp.eq.s32.totalorder %s15, 0
      %p42 = por %p40, %p41
      %s44 = sadd.s32 %s43, 1
      %p47 = scmp.eq.s32.totalorder %s9, 2
      %p48 = scmp.ne.s32.totalorder %s43, %s45
      %p49 = scmp.eq.s32.totalorder %s9, 0
      %p50 = por %p48, %p49
      %p51 = scmp.ne.s32.totalorder %s43, %s45
      %p52 = scmp.eq.s32.totalorder %s14, 2
      %p53 = por %p51, %p52
      %p54 = scmp.ne.s32.totalorder %s45, %s46
      %p55 = scmp.eq.s32.totalorder %s14, 0
      %p56 = por %p54, %p55
      %p57 = scmp.ne.s32.totalorder %s45, %s46
      %p58 = scmp.eq.s32.totalorder %s15, 2
      %p59 = por %p57, %p58
      %p61 = scmp.ne.s32.totalorder %s46, %s60
      %p62 = scmp.eq.s32.totalorder %s15, 0
      %p63 = por %p61, %p62
      %s65 = sadd.s32 %s64, 1
      %p68 = scmp.eq.s32.totalorder %s9, 2
      %p69 = scmp.ne.s32.totalorder %s64, %s66
      %p70 = scmp.eq.s32.totalorder %s9, 0
      %p71 = por %p69, %p70
      %p72 = scmp.ne.s32.totalorder %s64, %s66
      %p73 = scmp.eq.s32.totalorder %s14, 2
      %p74 = por %p72, %p73
      %p75 = scmp.ne.s32.totalorder %s66, %s67
      %p76 = scmp.eq.s32.totalorder %s14, 0
      %p77 = por %p75, %p76
      %p78 = scmp.ne.s32.totalorder %s66, %s67
      %p79 = scmp.eq.s32.totalorder %s15, 2
      %p80 = por %p78, %p79
      %p82 = scmp.ne.s32.totalorder %s67, %s81
      %p83 = scmp.eq.s32.totalorder %s15, 0
      %p84 = por %p82, %p83
      %p85 = scmp.le.s32.totalorder 1, %s9
      %p86 = scmp.lt.s32.totalorder %s9, 4
      %p87 = pnand %p85, %p86
      %p88 = pneg %p87
      // Predicated region
      $region9: #{focal_ace_loss.1} parent=5 // pred_check
        _
      $region10: #{focal_ace_loss.1} parent=5 // pred_check_branch
        %90 = sbr.rel (%p87) target = $region12
      $region11: #{focal_ace_loss.1} parent=5 // pred_region
        %s91 = ssub.s32 %s9, 1
        // Predicated region
        $region13: #{focal_ace_loss.1} parent=11 // pred_check
          %p92 = pneg %p56
        $region14: #{focal_ace_loss.1} parent=11 // pred_check_branch
          %94 = sbr.rel (%p92) target = $region16
        $region15: #{focal_ace_loss.1} parent=11 // pred_region
          _
        $region16: #{focal_ace_loss.1} parent=11 // pred_fallthru
          _
      $region12: #{focal_ace_loss.1} parent=5 // pred_fallthru
        _
      %p95 = scmp.lt.s32.totalorder %s9, 3
      // Predicated region
      $region17: #{focal_ace_loss.1} parent=5 // pred_check
        %p96 = pneg %p95
      $region18: #{focal_ace_loss.1} parent=5 // pred_check_branch
        %98 = sbr.rel (%p96) target = $region20
      $region19: #{focal_ace_loss.1} parent=5 // pred_region
        // Predicated region
        $region21: #{focal_ace_loss.1} parent=19 // pred_check
          %p99 = pneg %p29
        $region22: #{focal_ace_loss.1} parent=19 // pred_check_branch
          %101 = sbr.rel (%p99) target = $region24
        $region23: #{focal_ace_loss.1} parent=19 // pred_region
          %s102 = sand.u32 %s19, 1
          %s103 = sand.u32 %s19, 1
          %s104 = smul.addr %s103, 64
          %s105 = scalar_lea.vmem [#allocation3], %s104
          %s106 = smul.addr %s9, 8
          %s107 = scalar_lea.vmem %s0, %s106
          // Predicated region
          $region25: #{focal_ace_loss.1} parent=23 // pred_check
            _
          $region26: #{focal_ace_loss.1} parent=23 // pred_check_branch
            %109 = sbr.rel (0) target = $region28
          $region27: #{focal_ace_loss.1} parent=23 // pred_region
            // Predicated region
            $region29: #{focal_ace_loss.1} parent=27 // pred_check
              _
            $region30: #{focal_ace_loss.1} parent=27 // pred_check_branch
              %111 = sbr.rel (0) target = $region32
            $region31: #{focal_ace_loss.1} parent=27 // pred_region
              // Predicated region
              $region44: #{focal_ace_loss.1} parent=31 // pred_check
                _
              $region45: #{focal_ace_loss.1} parent=31 // pred_check_branch
                %140 = sbr.rel (0) target = $region47
              $region46: #{focal_ace_loss.1} parent=31 // pred_region
                loop: start=0, step=1, limit=1
                $region48: #{focal_ace_loss.1} parent=46 // loop_pre_header
                  _
                $region49: #{focal_ace_loss.1} parent=46 // loop_header
                  %s142 = sphi 0, %s146
                  %p143 = scmp.ge.s32.totalorder %s142, 1
                  %s147 = sphi %s107, %s107
                  %s148 = sphi %s105, %s105
                $region50: #{focal_ace_loss.1} parent=46 // loop_header_branch
                  %145 = sbr.rel (%p143) target = $region54
                $region51: #{focal_ace_loss.1} parent=46 // loop_body
                  %v149 = vld [vmem:[%s147] sm:$0xff]
                  %150 = vst [vmem:[%s148] sm:$0xff] %v149
                  %v151 = vld [vmem:[%s147 + $0x18] sm:$0xff]
                  %152 = vst [vmem:[%s148 + $0x8] sm:$0xff] %v151
                  %v153 = vld [vmem:[%s147 + $0x30] sm:$0xff]
                  %154 = vst [vmem:[%s148 + $0x10] sm:$0xff] %v153
                  %v155 = vld [vmem:[%s147 + $0x48] sm:$0xff]
                  %156 = vst [vmem:[%s148 + $0x18] sm:$0xff] %v155
                  %v157 = vld [vmem:[%s147 + $0x60] sm:$0xff]
                  %158 = vst [vmem:[%s148 + $0x20] sm:$0xff] %v157
                  %v159 = vld [vmem:[%s147 + $0x78] sm:$0xff]
                  %160 = vst [vmem:[%s148 + $0x28] sm:$0xff] %v159
                  %v161 = vld [vmem:[%s147 + $0x90] sm:$0xff]
                  %162 = vst [vmem:[%s148 + $0x30] sm:$0xff] %v161
                  %v163 = vld [vmem:[%s147 + $0xa8] sm:$0xff]
                  %164 = vst [vmem:[%s148 + $0x38] sm:$0xff] %v163
                $region52: #{focal_ace_loss.1} parent=46 // loop_footer
                  %s146 = sadd.s32 1, %s142
                $region53: #{focal_ace_loss.1} parent=46 // loop_footer_branch
                  %141 = sbr.rel target = $region49
                $region54: #{focal_ace_loss.1} parent=46 // loop_exit
                  _
              $region47: #{focal_ace_loss.1} parent=31 // pred_fallthru
                _
              // Predicated region
              $region55: #{focal_ace_loss.1} parent=31 // pred_check
                _
              $region56: #{focal_ace_loss.1} parent=31 // pred_check_branch
                %166 = sbr.rel target = $region58
              $region57: #{focal_ace_loss.1} parent=31 // pred_region
                _
              $region58: #{focal_ace_loss.1} parent=31 // pred_fallthru
                _
            $region32: #{focal_ace_loss.1} parent=27 // pred_fallthru
              _
            // Predicated region
            $region33: #{focal_ace_loss.1} parent=27 // pred_check
              _
            $region34: #{focal_ace_loss.1} parent=27 // pred_check_branch
              %113 = sbr.rel target = $region36
            $region35: #{focal_ace_loss.1} parent=27 // pred_region
              loop: start=0, step=1, limit=1
              $region37: #{focal_ace_loss.1} parent=35 // loop_pre_header
                _
              $region38: #{focal_ace_loss.1} parent=35 // loop_header
                %s116 = sphi 0, %s120
                %p117 = scmp.ge.s32.totalorder %s116, 1
                %s121 = sphi %s107, %s107
                %s122 = sphi %s105, %s105
              $region39: #{focal_ace_loss.1} parent=35 // loop_header_branch
                %119 = sbr.rel (%p117) target = $region43
              $region40: #{focal_ace_loss.1} parent=35 // loop_body
                %v123 = vld [vmem:[%s121] sm:$0xff]
                %124 = vst [vmem:[%s122] sm:$0xff] %v123
                %v125 = vld [vmem:[%s121 + $0x18] sm:$0xff]
                %126 = vst [vmem:[%s122 + $0x8] sm:$0xff] %v125
                %v127 = vld [vmem:[%s121 + $0x30] sm:$0xff]
                %128 = vst [vmem:[%s122 + $0x10] sm:$0xff] %v127
                %v129 = vld [vmem:[%s121 + $0x48] sm:$0xff]
                %130 = vst [vmem:[%s122 + $0x18] sm:$0xff] %v129
                %v131 = vld [vmem:[%s121 + $0x60] sm:$0xff]
                %132 = vst [vmem:[%s122 + $0x20] sm:$0xff] %v131
                %v133 = vld [vmem:[%s121 + $0x78] sm:$0xff]
                %134 = vst [vmem:[%s122 + $0x28] sm:$0xff] %v133
                %v135 = vld [vmem:[%s121 + $0x90] sm:$0xff]
                %136 = vst [vmem:[%s122 + $0x30] sm:$0xff] %v135
                %v137 = vld [vmem:[%s121 + $0xa8] sm:$0xff]
                %138 = vst [vmem:[%s122 + $0x38] sm:$0xff] %v137
              $region41: #{focal_ace_loss.1} parent=35 // loop_footer
                %s120 = sadd.s32 1, %s116
              $region42: #{focal_ace_loss.1} parent=35 // loop_footer_branch
                %115 = sbr.rel target = $region38
              $region43: #{focal_ace_loss.1} parent=35 // loop_exit
                _
            $region36: #{focal_ace_loss.1} parent=27 // pred_fallthru
              _
          $region28: #{focal_ace_loss.1} parent=23 // pred_fallthru
            _
          %167 = vnop
        $region24: #{focal_ace_loss.1} parent=19 // pred_fallthru
          _
      $region20: #{focal_ace_loss.1} parent=5 // pred_fallthru
        _
      %p168 = scmp.le.s32.totalorder 1, %s9
      %p169 = scmp.lt.s32.totalorder %s9, 4
      %p170 = pnand %p168, %p169
      %p171 = pneg %p170
      // Predicated region
      $region59: #{focal_ace_loss.1} parent=5 // pred_check
        _
      $region60: #{focal_ace_loss.1} parent=5 // pred_check_branch
        %173 = sbr.rel (%p170) target = $region62
      $region61: #{focal_ace_loss.1} parent=5 // pred_region
        %s174 = ssub.s32 %s9, 1
        %s175 = sand.u32 %s22, 1
        %s176 = sand.u32 %s22, 1
        %s177 = smul.addr %s176, 64
        %s178 = scalar_lea.vmem [#allocation3], %s177
        // Predicated region
        $region63: #{focal_ace_loss.1} parent=61 // pred_check
          %p179 = pneg %p35
        $region64: #{focal_ace_loss.1} parent=61 // pred_check_branch
          %181 = sbr.rel (%p179) target = $region66
        $region65: #{focal_ace_loss.1} parent=61 // pred_region
          _
        $region66: #{focal_ace_loss.1} parent=61 // pred_fallthru
          _
        %s182 = sand.u32 %s22, 1
        %s183 = sand.u32 %s22, 1
        %s184 = smul.addr %s183, 64
        %s185 = scalar_lea.vmem [#allocation3], %s184
        %p186 = pneg %p35
        %p187 = pneg %p32
        %p188 = pneg %p56
        %p189 = pneg %p53
        %p190 = pneg %p77
        %p191 = pneg %p74
        %p192 = scmp.eq.s32.totalorder %s14, 0
        // Predicated region
        $region67: #{focal_ace_loss.1} parent=61 // pred_check
          %p193 = pneg %p192
        $region68: #{focal_ace_loss.1} parent=61 // pred_check_branch
          %195 = sbr.rel (%p193) target = $region70
        $region69: #{focal_ace_loss.1} parent=61 // pred_region
          %vm196 = vcmask 254976
          %197 = vst.msk [vmem:[#allocation2] sm:$0x3] %vm196, 0.0
        $region70: #{focal_ace_loss.1} parent=61 // pred_fallthru
          _
        %v198 = vld [vmem:[%s178] sm:$0xff]
        %v199 = vld [vmem:[%s178 + $0x8] sm:$0xff]
        %v200 = vld [vmem:[%s178 + $0x10] sm:$0xff]
        %v201 = vld [vmem:[%s178 + $0x18] sm:$0xff]
        %v202 = vld [vmem:[%s178 + $0x20] sm:$0xff]
        %v203 = vld [vmem:[%s178 + $0x28] sm:$0xff]
        %v204 = vld [vmem:[%s178 + $0x30] sm:$0xff]
        %v205 = vld [vmem:[%s178 + $0x38] sm:$0xff]
        %v206 = vmax.f32 %v198, %v200
        %v207 = vmax.f32 %v199, %v201
        %v208 = vmax.f32 %v206, %v207
        %v209 = vrot.slane %v208, 4
        %v210 = vmax.f32 %v208, %v209
        %v211 = vrot.slane %v210, 2
        %v212 = vmax.f32 %v210, %v211
        %v213 = vrot.slane %v212, 1
        %v214 = vmax.f32 %v212, %v213
        %v215 = vmax.f32 %v202, %v204
        %v216 = vmax.f32 %v203, %v205
        %v217 = vmax.f32 %v215, %v216
        %v218 = vrot.slane %v217, 4
        %v219 = vmax.f32 %v217, %v218
        %v220 = vrot.slane %v219, 2
        %v221 = vmax.f32 %v219, %v220
        %v222 = vrot.slane %v221, 1
        %v223 = vmax.f32 %v221, %v222
        %v224 = vsub.f32 %v198, %v214
        %v225 = vsub.f32 %v199, %v214
        %v226 = vsub.f32 %v200, %v214
        %v227 = vsub.f32 %v201, %v214
        %v228 = vsub.f32 %v202, %v223
        %v229 = vsub.f32 %v203, %v223
        %v230 = vsub.f32 %v204, %v223
        %v231 = vsub.f32 %v205, %v223
        %v232 = vmul.f32 %v224, 1.442695
        %v233 = vpow.pop %v232
        %v234 = vmul.f32 %v225, 1.442695
        %v235 = vpow.pop %v234
        %v236 = vmul.f32 %v226, 1.442695
        %v237 = vpow.pop %v236
        %v238 = vmul.f32 %v227, 1.442695
        %v239 = vpow.pop %v238
        %v240 = vmul.f32 %v228, 1.442695
        %v241 = vpow.pop %v240
        %v242 = vmul.f32 %v229, 1.442695
        %v243 = vpow.pop %v242
        %v244 = vmul.f32 %v230, 1.442695
        %v245 = vpow.pop %v244
        %v246 = vmul.f32 %v231, 1.442695
        %v247 = vpow.pop %v246
        %v248 = vadd.f32 %v233, %v235
        %v249 = vadd.f32 %v248, %v237
        %v250 = vadd.f32 %v249, %v239
        %v251 = vrot.slane %v250, 4
        %v252 = vadd.f32 %v250, %v251
        %v253 = vrot.slane %v252, 2
        %v254 = vadd.f32 %v252, %v253
        %v255 = vrot.slane %v254, 1
        %v256 = vadd.f32 %v254, %v255
        %v257 = vadd.f32 %v241, %v243
        %v258 = vadd.f32 %v257, %v245
        %v259 = vadd.f32 %v258, %v247
        %v260 = vrot.slane %v259, 4
        %v261 = vadd.f32 %v259, %v260
        %v262 = vrot.slane %v261, 2
        %v263 = vadd.f32 %v261, %v262
        %v264 = vrot.slane %v263, 1
        %v265 = vadd.f32 %v263, %v264
        %v266 = vrcp.pop %v256
        %v267 = vrcp.pop %v265
        %v268 = vmul.f32 %v233, %v266
        %v269 = vmul.f32 %v235, %v266
        %v270 = vmul.f32 %v237, %v266
        %v271 = vmul.f32 %v239, %v266
        %v272 = vmul.f32 %v241, %v267
        %v273 = vmul.f32 %v243, %v267
        %v274 = vmul.f32 %v245, %v267
        %v275 = vmul.f32 %v247, %v267
        %v276 = vlaneseq
        %v277 = vand.u32 %v276, 127
        %s278 = smul.u32 %s14, 128
        %v279 = vstv %s278
        %v280 = vadd.s32 %v277, %v279
        %vm281 = vcmp.lt.s32.totalorder %v280, 272
        %v282 = vsel %vm281, 1, 0
        %vm283 = vcmp.eq.s32.totalorder %v282, 1
        %v284 = vsel %vm283, %v268, 0.0
        %v285 = vsel %vm283, %v269, 0.0
        %v286 = vsel %vm283, %v270, 0.0
        %v287 = vsel %vm283, %v271, 0.0
        %v288 = vsel %vm283, %v272, 0.0
        %v289 = vsel %vm283, %v273, 0.0
        %v290 = vsel %vm283, %v274, 0.0
        %v291 = vsel %vm283, %v275, 0.0
        %v292 = vld [vmem:[#allocation2] sm:$0x3]
        %293 = vadd.xlane.f32.xlu0 %v284
        %v294 = vpop.xlane.xlu0 %293
        %295 = vadd.xlane.f32.xlu0 %v285
        %v296 = vpop.xlane.xlu0 %295
        %297 = vadd.xlane.f32.xlu0 %v286
        %v298 = vpop.xlane.xlu0 %297
        %299 = vadd.xlane.f32.xlu0 %v287
        %v300 = vpop.xlane.xlu0 %299
        %301 = vadd.xlane.f32.xlu0 %v288
        %v302 = vpop.xlane.xlu0 %301
        %303 = vadd.xlane.f32.xlu0 %v289
        %v304 = vpop.xlane.xlu0 %303
        %305 = vadd.xlane.f32.xlu0 %v290
        %v306 = vpop.xlane.xlu0 %305
        %307 = vadd.xlane.f32.xlu0 %v291
        %v308 = vpop.xlane.xlu0 %307
        %v317 = vlaneseq
        %v318 = vshrl.u32 %v317, 7
        %v319 = vsub.s32 %v277, %v318
        %v320 = vrot.slane %v294, %v319
        %v321 = vadd.s32 %v277, 4294967288
        %v322 = vlaneseq
        %v323 = vshrl.u32 %v322, 7
        %v324 = vsub.s32 %v321, %v323
        %v325 = vrot.slane %v296, %v324
        %vm326 = vcmask 130112
        %v327 = vsel %vm326, %v325, %v320
        %v328 = vadd.s32 %v277, 4294967280
        %v329 = vlaneseq
        %v330 = vshrl.u32 %v329, 7
        %v331 = vsub.s32 %v328, %v330
        %v332 = vrot.slane %v298, %v331
        %vm333 = vcmask 195712
        %v334 = vsel %vm333, %v332, %v327
        %v335 = vadd.s32 %v277, 4294967272
        %v336 = vlaneseq
        %v337 = vshrl.u32 %v336, 7
        %v338 = vsub.s32 %v335, %v337
        %v339 = vrot.slane %v300, %v338
        %vm340 = vcmask 261312
        %v341 = vsel %vm340, %v339, %v334
        %v342 = vlaneseq
        %v343 = vshrl.u32 %v342, 7
        %v344 = vsub.s32 %v277, %v343
        %v345 = vrot.slane %v302, %v344
        %v346 = vlaneseq
        %v347 = vshrl.u32 %v346, 7
        %v348 = vsub.s32 %v321, %v347
        %v349 = vrot.slane %v304, %v348
        %v350 = vsel %vm326, %v349, %v345
        %v351 = vlaneseq
        %v352 = vshrl.u32 %v351, 7
        %v353 = vsub.s32 %v328, %v352
        %v354 = vrot.slane %v306, %v353
        %v355 = vsel %vm333, %v354, %v350
        %v356 = vlaneseq
        %v357 = vshrl.u32 %v356, 7
        %v358 = vsub.s32 %v335, %v357
        %v359 = vrot.slane %v308, %v358
        %v360 = vsel %vm340, %v359, %v355
        %vm361 = vcmask 1041409
        %v362 = vsel %vm361, %v360, %v341
        %v364 = vadd.f32 %v292, %v362
        %vm365 = vcmask 254976
        %366 = vst.msk [vmem:[#allocation2] sm:$0x3] %vm365, %v364
        %p367 = scmp.eq.s32.totalorder %s14, 2
        // Predicated region
        $region71: #{focal_ace_loss.1} parent=61 // pred_check
          %p368 = pneg %p367
        $region72: #{focal_ace_loss.1} parent=61 // pred_check_branch
          %370 = sbr.rel (%p368) target = $region74
        $region73: #{focal_ace_loss.1} parent=61 // pred_region
          %v371 = vld [vmem:[%s1] sm:$0x3]
          %v372 = vld [vmem:[#allocation2] sm:$0x3]
          %v373 = vlog2.pop %v372
          %v374 = vmul.f32 %v373, 0.6931472
          %v375 = vmul.f32 %v371, %v374
          %v376 = vsel %vm365, %v375, 0.0
          %377 = vadd.xlane.f32.xlu0 %v376
          %v378 = vpop.xlane.xlu0 %377
          %v379 = vrot.slane %v378, 4
          %v380 = vadd.f32 %v378, %v379
          %v381 = vrot.slane %v380, 2
          %v382 = vadd.f32 %v380, %v381
          %v383 = vrot.slane %v382, 1
          %v384 = vadd.f32 %v382, %v383
          %s385 = vtos %v384
          %v386 = vsel %vm365, %v371, 0.0
          %387 = vadd.xlane.f32.xlu0 %v386
          %v388 = vpop.xlane.xlu0 %387
          %v389 = vrot.slane %v388, 4
          %v390 = vadd.f32 %v388, %v389
          %v391 = vrot.slane %v390, 2
          %v392 = vadd.f32 %v390, %v391
          %v393 = vrot.slane %v392, 1
          %v394 = vadd.f32 %v392, %v393
          %s395 = vtos %v394
          %s396 = smul.f32 %s395, 5.605802
          %s397 = ssub.f32 %s385, %s396
          %s398 = ssub.f32 0.0, %s397
          %s399 = smul.f32 %s398, 0.0018382353
          %s400 = ssub.f32 0.0, %s399
          %v401 = vstv %s400
          %v402 = vmul.f32 %v401, 1.442695
          %v403 = vpow.pop %v402
          %s404 = vtos %v403
          %s405 = ssub.f32 1.0, %s404
          %s406 = smul.f32 %s405, 0.5
          %s407 = smul.f32 %s406, %s399
          %v408 = vstv %s407
          %409 = vst [vmem:[#allocation4] sm:$0x1] %v408
        $region74: #{focal_ace_loss.1} parent=61 // pred_fallthru
          _
        // Predicated region
        $region75: #{focal_ace_loss.1} parent=61 // pred_check
          %p410 = pneg %p74
        $region76: #{focal_ace_loss.1} parent=61 // pred_check_branch
          %412 = sbr.rel (%p410) target = $region78
        $region77: #{focal_ace_loss.1} parent=61 // pred_region
          %s414 = ssub.s32 16, 16
          %415 = vsyncadd [#allocation5], %s414
          %s417 = sshll.u32 [#allocation4], 4
          %s418 = int_to_ptr.vmem [resolvable:$true] %s417
          %420 = dma.vmem_to_hbm [thread:$0]  %s418, 16, %s2, [#allocation5]
        $region78: #{focal_ace_loss.1} parent=61 // pred_fallthru
          _
        // Predicated region
        $region79: #{focal_ace_loss.1} parent=61 // pred_check
          %p421 = pneg %p74
        $region80: #{focal_ace_loss.1} parent=61 // pred_check_branch
          %423 = sbr.rel (%p421) target = $region82
        $region81: #{focal_ace_loss.1} parent=61 // pred_region
          %424 = dma.done [#allocation5], 16
        $region82: #{focal_ace_loss.1} parent=61 // pred_fallthru
          _
      $region62: #{focal_ace_loss.1} parent=5 // pred_fallthru
        _
      %p425 = scmp.le.s32.totalorder 2, %s9
      // Predicated region
      $region83: #{focal_ace_loss.1} parent=5 // pred_check
        %p426 = pneg %p425
      $region84: #{focal_ace_loss.1} parent=5 // pred_check_branch
        %428 = sbr.rel (%p426) target = $region86
      $region85: #{focal_ace_loss.1} parent=5 // pred_region
        %s429 = ssub.s32 %s9, 2
      $region86: #{focal_ace_loss.1} parent=5 // pred_fallthru
        _
    $region6: #{focal_ace_loss.1} parent=1 // loop_footer
      %s13 = sadd.s32 1, %s9
    $region7: #{focal_ace_loss.1} parent=1 // loop_footer_branch
      %8 = sbr.rel target = $region3
    $region8: #{focal_ace_loss.1} parent=1 // loop_exit
      _
    %430 = vsyncpa [#allocation5], 1
    %s431 = scalar_lea.sflag [#allocation5], 1
    %432 = vsyncpa %s431, 1

</llo_original>
